<compile_context>
chip_gen: v7x
topology: tpu7x:2x2x1
jax: 0.10.0
libtpu: 0.0.40
codegen_flags: <defaults>
</compile_context>

<pallas_src>
import functools

import jax
import jax.numpy as jnp
from jax import lax
from jax.experimental import pallas as pl
from jax.experimental.pallas import tpu as pltpu

LN_EPS = 1e-5
_LANE = 128
_SUBLANE = 8
# Fits inside the default scoped-VMEM limit on v5e (16 MiB), v6e and v7x (32 MiB).
_VMEM_BUDGET = 12 * 1024 * 1024


def _round_up(x, m):
    return ((x + m - 1) // m) * m


def _patch_embed_kernel(xp_ref, w_ref, b_ref, g_ref, beta_ref, o_ref, acc_ref):
    # xp_ref  : (TM, TK)  bf16 patch-matrix tile
    # w_ref   : (TK, E)   bf16 flattened conv-weight tile
    # b_ref   : (1, E)    f32 conv bias
    # g_ref   : (1, E)    f32 LayerNorm gamma
    # beta_ref: (1, E)    f32 LayerNorm beta
    # o_ref   : (TM, E)   output tile (bf16 or f32)
    # acc_ref : (TM, E)   f32 accumulator scratch (persists across the K grid axis)
    k = pl.program_id(1)

    @pl.when(k == 0)
    def _init():
        acc_ref[...] = jnp.zeros_like(acc_ref)

    acc_ref[...] += jnp.dot(xp_ref[...], w_ref[...],
                            preferred_element_type=jnp.float32)

    @pl.when(k == pl.num_programs(1) - 1)
    def _epilogue():
        acc = acc_ref[...] + b_ref[...]                       # f32, bias before LN
        mean = jnp.mean(acc, axis=-1, keepdims=True)
        centered = acc - mean
        var = jnp.mean(centered * centered, axis=-1, keepdims=True)
        # Fold gamma into the normalization scale (one fewer full-width VPU mul);
        # rsqrt lowers to the EUP.
        scale = lax.rsqrt(var + LN_EPS) * g_ref[...]
        o_ref[...] = (centered * scale + beta_ref[...]).astype(o_ref.dtype)


def _choose_blocks(M, K, E, out_itemsize, vmem_budget=_VMEM_BUDGET, max_block_m=1024):
    """Pick (block_m, block_k, padded_K).

    block_k always divides padded_K exactly (zero-padding the contraction is exact);
    block_m is a multiple of 8 (or == M).  Accounting assumes bf16 xp/weight tiles,
    double buffering on streamed arrays, an f32 accumulator and f32 epilogue temps.
    """
    K128 = _round_up(K, _LANE)

    def fixed_bytes(bk):
        # double-buffered bf16 weight tile + f32 bias/gamma/beta (tiny)
        return 2 * bk * E * 2 + 6 * E * 4

    def per_row_bytes(bk):
        xp_tile = 2 * bk * 2            # double-buffered bf16 (bm, bk) tile
        out_tile = 2 * E * out_itemsize  # double-buffered (bm, E) output tile
        acc = E * 4                      # f32 accumulator scratch
        temps = 2 * E * 4                # f32 matmul/LN intermediates (headroom)
        return xp_tile + out_tile + acc + temps

    # Prefer keeping all of K resident (grid_k == 1); fall back to K tiling when the
    # resident weight would squeeze the row tile below ~256 rows.
    candidates = [K128]
    for bk in (1024, 512, 256, 128):
        if bk < K128:
            candidates.append(bk)

    best = None
    for bk in candidates:
        avail = vmem_budget - fixed_bytes(bk)
        if avail <= 0:
            continue
        bm = min(max_block_m, avail // per_row_bytes(bk), M)
        if bm < M:
            bm = (bm // _SUBLANE) * _SUBLANE
        if bm < min(M, _SUBLANE):
            continue
        best = (int(bm), int(bk))
        if bm >= min(M, 256):            # big-enough row tile -> keep the largest K tile
            break
    if best is None:
        raise ValueError(
            "embed_dim too large for the VMEM budget; needs an E-tiled LayerNorm path")
    block_m, block_k = best
    return block_m, block_k, _round_up(K, block_k)


def patch_embedding(x, weight, bias, gamma, beta, *, patch_size,
                    out_dtype=None, block_m=None, block_k=None,
                    vmem_budget=_VMEM_BUDGET):
    """x: (B, C, L) with L % patch_size == 0; weight: (E, C, P); bias/gamma/beta: (E,).

    Returns (B, L // patch_size, E) == Conv1d(stride=kernel) -> transpose(1,2) -> LayerNorm.
    Matmul operands are bf16 with f32 accumulation; pass out_dtype=jnp.bfloat16 to also
    halve the output HBM stream (default keeps x.dtype to match the PyTorch module).
    """
    B, C, L = x.shape
    E = weight.shape[0]
    P = patch_size
    assert L % P == 0, "length must be divisible by patch_size"
    N = L // P
    M, K0 = B * N, C * P
    out_dtype = jnp.dtype(out_dtype) if out_dtype is not None else jnp.dtype(x.dtype)
    out_itemsize = out_dtype.itemsize

    auto_bm, auto_bk, _ = _choose_blocks(M, K0, E, out_itemsize, vmem_budget)
    if block_k is None:
        block_k = auto_bk
    else:
        block_k = _round_up(min(block_k, _round_up(K0, _LANE)), _LANE)
    padded_k = _round_up(K0, block_k)        # block_k divides padded_k exactly

    if block_m is None:
        block_m = auto_bm
    block_m = min(block_m, M)
    if block_m < M:
        block_m = max(_SUBLANE, (block_m // _SUBLANE) * _SUBLANE)
    # Keep at least two row tiles so the "parallel" M axis can split across the two
    # TensorCores on v7x (a single extra sequential grid step on v5e/v6e is noise).
    if M >= 2 * _SUBLANE:
        block_m = min(block_m, _round_up(pl.cdiv(M, 2), _SUBLANE))

    grid = (pl.cdiv(M, block_m), padded_k // block_k)

    # Patchify in bf16 so the unavoidable layout copy is half-size.
    # TODO(synk): channels-last (B, L, C) input upstream makes this a free reshape.
    cdt = jnp.bfloat16
    xp = x.astype(cdt).reshape(B, C, N, P).transpose(0, 2, 1, 3).reshape(M, K0)
    wf = jnp.transpose(weight.reshape(E, K0)).astype(cdt)          # (K0, E)
    if padded_k != K0:                                             # exact: zeros in the
        xp = jnp.pad(xp, ((0, 0), (0, padded_k - K0)))             # contraction dim
        wf = jnp.pad(wf, ((0, padded_k - K0), (0, 0)))
    b2 = bias.astype(jnp.float32).reshape(1, E)
    g2 = gamma.astype(jnp.float32).reshape(1, E)
    be2 = beta.astype(jnp.float32).reshape(1, E)

    cost = pl.CostEstimate(
        flops=2 * M * padded_k * E + 10 * M * E,
        transcendentals=M,                                          # one rsqrt per row
        bytes_accessed=2 * (M * padded_k + padded_k * E) + out_itemsize * M * E + 12 * E,
    )

    out = pl.pallas_call(
        _patch_embed_kernel,
        out_shape=jax.ShapeDtypeStruct((M, E), out_dtype),
        grid=grid,
        in_specs=[
            pl.BlockSpec((block_m, block_k), lambda i, k: (i, k)),  # streamed xp tiles
            pl.BlockSpec((block_k, E), lambda i, k: (k, 0)),        # weight K-tiles
            pl.BlockSpec((1, E), lambda i, k: (0, 0)),              # bias  (resident)
            pl.BlockSpec((1, E), lambda i, k: (0, 0)),              # gamma (resident)
            pl.BlockSpec((1, E), lambda i, k: (0, 0)),              # beta  (resident)
        ],
        out_specs=pl.BlockSpec((block_m, E), lambda i, k: (i, 0)),
        scratch_shapes=[pltpu.VMEM((block_m, E), jnp.float32)],     # f32 accumulator
        compiler_params=pltpu.CompilerParams(
            dimension_semantics=("parallel", "arbitrary")),
        cost_estimate=cost,
    )(xp, wf, b2, g2, be2)

    return out.reshape(B, N, E)


def _reference(x, weight, bias, gamma, beta, patch_size):
    """Pure-JAX f32 reference of Conv1d(stride=kernel) + transpose + LayerNorm."""
    B, C, L = x.shape
    E = weight.shape[0]
    P = patch_size
    N = L // P
    xp = x.reshape(B, C, N, P).transpose(0, 2, 1, 3).reshape(B, N, C * P)
    y = xp @ weight.reshape(E, C * P).T + bias
    mu = y.mean(-1, keepdims=True)
    var = ((y - mu) ** 2).mean(-1, keepdims=True)
    return (y - mu) / jnp.sqrt(var + LN_EPS) * gamma + beta


def _make_inputs(key, B, C, L, P, E):
    kx, kw, kb = jax.random.split(key, 3)
    x = jax.random.normal(kx, (B, C, L), dtype=jnp.float32)
    fan_in = C * P
    bound = 1.0 / (fan_in ** 0.5)                    # PyTorch Conv1d default init range
    weight = jax.random.uniform(kw, (E, C, P), jnp.float32, -bound, bound)
    bias = jax.random.uniform(kb, (E,), jnp.float32, -bound, bound)
    gamma = jnp.ones((E,), jnp.float32)              # LayerNorm weight
    beta = jnp.zeros((E,), jnp.float32)              # LayerNorm bias
    return x, weight, bias, gamma, beta


if __name__ == "__main__":
    key = jax.random.PRNGKey(0)
    k_a, k_b = jax.random.split(key)

    # (a) Module-default channels / patch size (K = 16*50 = 800 -> padded to 896),
    #     bf16 output (the recommended perf config).  M = 16 -> grid_m = 2.
    B, C, P, E, L = 2, 16, 50, 256, 400
    x, w, b, g, be = _make_inputs(k_a, B, C, L, P, E)
    fn_a = jax.jit(functools.partial(patch_embedding, patch_size=P,
                                     out_dtype=jnp.bfloat16))
    out_a = jax.block_until_ready(fn_a(x, w, b, g, be))
    assert out_a.shape == (B, L // P, E), out_a.shape
    ref_a = _reference(x, w, b, g, be, P)
    err_a = float(jnp.max(jnp.abs(out_a.astype(jnp.float32) - ref_a)))
    assert jnp.allclose(out_a.astype(jnp.float32), ref_a, atol=7.5e-2, rtol=7.5e-2), err_a

    # (b) Lane-dense K = 128, multi-row-tile path (M = 128 -> grid_m = 2), f32 output.
    B, C, P, E, L = 2, 16, 8, 256, 512
    x, w, b, g, be = _make_inputs(k_b, B, C, L, P, E)
    fn_b = jax.jit(functools.partial(patch_embedding, patch_size=P))
    out_b = jax.block_until_ready(fn_b(x, w, b, g, be))
    assert out_b.shape == (B, L // P, E), out_b.shape
    ref_b = _reference(x, w, b, g, be, P)
    err_b = float(jnp.max(jnp.abs(out_b - ref_b)))
    assert jnp.allclose(out_b, ref_b, atol=4e-2, rtol=4e-2), err_b

    print("KERNEL_OK")
</pallas_src>

<mosaic_0001>
module attributes {stable_mosaic.version = 11 : i64} {
  func.func @_patch_embed_kernel(%arg0: i32, %arg1: i32, %arg2: memref<8x896xbf16, #tpu.memory_space<vmem>>, %arg3: memref<896x256xbf16, #tpu.memory_space<vmem>>, %arg4: memref<1x256xf32, #tpu.memory_space<vmem>>, %arg5: memref<1x256xf32, #tpu.memory_space<vmem>>, %arg6: memref<1x256xf32, #tpu.memory_space<vmem>>, %arg7: memref<8x256xbf16, #tpu.memory_space<vmem>>, %arg8: memref<8x256xf32, #tpu.memory_space<vmem>>) attributes {dimension_semantics = [#tpu.dimension_semantics<parallel>, #tpu.dimension_semantics<arbitrary>], iteration_bounds = array<i64: 2, 1>, scalar_prefetch = 0 : i64, scratch_operands = 1 : i64, tpu.core_type = #tpu.core_type<tc>, window_params = [{transform_indices = @transform_0, window_bounds = array<i64: 8, 896>}, {transform_indices = @transform_1, window_bounds = array<i64: 896, 256>}, {pipeline_mode = #tpu.pipeline_mode<synchronous>, transform_indices = @transform_2, window_bounds = array<i64: 1, 256>}, {pipeline_mode = #tpu.pipeline_mode<synchronous>, transform_indices = @transform_3, window_bounds = array<i64: 1, 256>}, {pipeline_mode = #tpu.pipeline_mode<synchronous>, transform_indices = @transform_4, window_bounds = array<i64: 1, 256>}, {transform_indices = @transform_5, window_bounds = array<i64: 8, 256>}]} {
    %c0_i32 = arith.constant 0 : i32
    %0 = arith.cmpi eq, %arg1, %c0_i32 : i32
    %1 = arith.extui %0 : i1 to i32
    %c0_i32_0 = arith.constant 0 : i32
    %2 = arith.cmpi ne, %1, %c0_i32_0 : i32
    scf.if %2 {
      %cst_10 = arith.constant 0.000000e+00 : f32
      %12 = vector.broadcast %cst_10 : f32 to vector<8x256xf32>
      %c0_11 = arith.constant 0 : index
      %c0_12 = arith.constant 0 : index
      %13 = vector.load %arg8[%c0_11, %c0_12] : memref<8x256xf32, #tpu.memory_space<vmem>>, vector<8x256xf32>
      tpu.vector_store %arg8[%c0_11, %c0_12], %12 {strides = array<i32>} : memref<8x256xf32, #tpu.memory_space<vmem>>, vector<8x256xf32>,
    } else {
    }
    %c0 = arith.constant 0 : index
    %c0_1 = arith.constant 0 : index
    %3 = vector.load %arg8[%c0, %c0_1] : memref<8x256xf32, #tpu.memory_space<vmem>>, vector<8x256xf32>
    %c0_2 = arith.constant 0 : index
    %c0_3 = arith.constant 0 : index
    %4 = vector.load %arg2[%c0_2, %c0_3] : memref<8x896xbf16, #tpu.memory_space<vmem>>, vector<8x896xbf16>
    %c0_4 = arith.constant 0 : index
    %c0_5 = arith.constant 0 : index
    %5 = vector.load %arg3[%c0_4, %c0_5] : memref<896x256xbf16, #tpu.memory_space<vmem>>, vector<896x256xbf16>
    %cst = arith.constant dense<0.000000e+00> : vector<8x256xf32>
    %6 = tpu.matmul %4, %5, %cst {dimension_numbers = #tpu.dot_dimension_numbers<[1], [0], [0], [1], [0, 0, 1, 1], [], []>} : vector<8x896xbf16>, vector<896x256xbf16>, vector<8x256xf32> -> vector<8x256xf32>
    %7 = arith.addf %3, %6 : vector<8x256xf32>
    %c0_6 = arith.constant 0 : index
    %c0_7 = arith.constant 0 : index
    %8 = vector.load %arg8[%c0_6, %c0_7] : memref<8x256xf32, #tpu.memory_space<vmem>>, vector<8x256xf32>
    tpu.vector_store %arg8[%c0_6, %c0_7], %7 {strides = array<i32>} : memref<8x256xf32, #tpu.memory_space<vmem>>, vector<8x256xf32>,
    %c0_i32_8 = arith.constant 0 : i32
    %9 = arith.cmpi eq, %arg1, %c0_i32_8 : i32
    %10 = arith.extui %9 : i1 to i32
    %c0_i32_9 = arith.constant 0 : i32
    %11 = arith.cmpi ne, %10, %c0_i32_9 : i32
    scf.if %11 {
      %c0_10 = arith.constant 0 : index
      %c0_11 = arith.constant 0 : index
      %12 = vector.load %arg8[%c0_10, %c0_11] : memref<8x256xf32, #tpu.memory_space<vmem>>, vector<8x256xf32>
      %c0_12 = arith.constant 0 : index
      %c0_13 = arith.constant 0 : index
      %13 = vector.load %arg4[%c0_12, %c0_13] : memref<1x256xf32, #tpu.memory_space<vmem>>, vector<1x256xf32>
      %14 = vector.broadcast %13 : vector<1x256xf32> to vector<8x256xf32>
      %15 = arith.addf %12, %14 : vector<8x256xf32>
      %cst_14 = arith.constant dense<0.000000e+00> : vector<8xf32>
      %16 = vector.multi_reduction <add>, %15, %cst_14 [1] : vector<8x256xf32> to vector<8xf32>
      %17 = vector.shape_cast %16 : vector<8xf32> to vector<8x1xf32>
      %cst_15 = arith.constant 2.560000e+02 : f32
      %18 = vector.broadcast %cst_15 : f32 to vector<8x1xf32>
      %19 = arith.divf %17, %18 : vector<8x1xf32>
      %20 = vector.broadcast %19 : vector<8x1xf32> to vector<8x256xf32>
      %21 = arith.subf %15, %20 : vector<8x256xf32>
      %22 = arith.mulf %21, %21 : vector<8x256xf32>
      %cst_16 = arith.constant dense<0.000000e+00> : vector<8xf32>
      %23 = vector.multi_reduction <add>, %22, %cst_16 [1] : vector<8x256xf32> to vector<8xf32>
      %24 = vector.shape_cast %23 : vector<8xf32> to vector<8x1xf32>
      %cst_17 = arith.constant 2.560000e+02 : f32
      %25 = vector.broadcast %cst_17 : f32 to vector<8x1xf32>
      %26 = arith.divf %24, %25 : vector<8x1xf32>
      %cst_18 = arith.constant 9.99999974E-6 : f32
      %27 = vector.broadcast %cst_18 : f32 to vector<8x1xf32>
      %28 = arith.addf %26, %27 : vector<8x1xf32>
      %29 = math.rsqrt %28 : vector<8x1xf32>
      %c0_19 = arith.constant 0 : index
      %c0_20 = arith.constant 0 : index
      %30 = vector.load %arg5[%c0_19, %c0_20] : memref<1x256xf32, #tpu.memory_space<vmem>>, vector<1x256xf32>
      %31 = vector.broadcast %29 : vector<8x1xf32> to vector<8x256xf32>
      %32 = vector.broadcast %30 : vector<1x256xf32> to vector<8x256xf32>
      %33 = arith.mulf %31, %32 : vector<8x256xf32>
      %34 = arith.mulf %21, %33 : vector<8x256xf32>
      %c0_21 = arith.constant 0 : index
      %c0_22 = arith.constant 0 : index
      %35 = vector.load %arg6[%c0_21, %c0_22] : memref<1x256xf32, #tpu.memory_space<vmem>>, vector<1x256xf32>
      %36 = vector.broadcast %35 : vector<1x256xf32> to vector<8x256xf32>
      %37 = arith.addf %34, %36 : vector<8x256xf32>
      %38 = arith.truncf %37 : vector<8x256xf32> to vector<8x256xbf16>
      %c0_23 = arith.constant 0 : index
      %c0_24 = arith.constant 0 : index
      %39 = vector.load %arg7[%c0_23, %c0_24] : memref<8x256xbf16, #tpu.memory_space<vmem>>, vector<8x256xbf16>
      tpu.vector_store %arg7[%c0_23, %c0_24], %38 {strides = array<i32>} : memref<8x256xbf16, #tpu.memory_space<vmem>>, vector<8x256xbf16>,
    } else {
    }
    return
  }
  func.func @transform_0(%arg0: i32, %arg1: i32) -> (i32, i32) {
    %c0_i32 = arith.constant 0 : i32
    return %arg0, %arg1 : i32, i32
  }
  func.func @transform_1(%arg0: i32, %arg1: i32) -> (i32, i32) {
    %c0_i32 = arith.constant 0 : i32
    %c0_i32_0 = arith.constant 0 : i32
    return %arg1, %c0_i32 : i32, i32
  }
  func.func @transform_2(%arg0: i32, %arg1: i32) -> (i32, i32) {
    %c0_i32 = arith.constant 0 : i32
    %c0_i32_0 = arith.constant 0 : i32
    %c0_i32_1 = arith.constant 0 : i32
    return %c0_i32, %c0_i32_0 : i32, i32
  }
  func.func @transform_3(%arg0: i32, %arg1: i32) -> (i32, i32) {
    %c0_i32 = arith.constant 0 : i32
    %c0_i32_0 = arith.constant 0 : i32
    %c0_i32_1 = arith.constant 0 : i32
    return %c0_i32, %c0_i32_0 : i32, i32
  }
  func.func @transform_4(%arg0: i32, %arg1: i32) -> (i32, i32) {
    %c0_i32 = arith.constant 0 : i32
    %c0_i32_0 = arith.constant 0 : i32
    %c0_i32_1 = arith.constant 0 : i32
    return %c0_i32, %c0_i32_0 : i32, i32
  }
  func.func @transform_5(%arg0: i32, %arg1: i32) -> (i32, i32) {
    %c0_i32 = arith.constant 0 : i32
    %c0_i32_0 = arith.constant 0 : i32
    return %arg0, %c0_i32 : i32, i32
  }
}

</mosaic_0001>

<llo_original>
// kernel: patch_embedding.1
$region0: #{patch_embedding.1}
  #allocation0 [shape = 'u32[]', space=smem, size = 0x4, offset = 0x4, fixed_abs, tag = 'smem constant byte address 0x4 - core index']
  #allocation1 [shape = 'u32[144,128]{1,0:T(1,128)}', space=vmem, size = 0x12000, scoped, tag = 'internal scratch']
  #allocation2 [shape = 'f32[8,256]{1,0:T(8,128)}', space=vmem, size = 0x2000, scoped, tag = 'scratch operand']
  %s0 = inlined_call_operand.vmem [shape: bf16[16,896], index: 0, kind: input, shape index: {}]
  %s1 = inlined_call_operand.vmem [shape: bf16[896,256], index: 1, kind: input, shape index: {}]
  %s2 = inlined_call_operand.vmem [shape: f32[1,256], index: 2, kind: input, shape index: {}]
  %s3 = inlined_call_operand.vmem [shape: f32[1,256], index: 3, kind: input, shape index: {}]
  %s4 = inlined_call_operand.vmem [shape: f32[1,256], index: 4, kind: input, shape index: {}]
  %s5 = inlined_call_operand.hbm [shape: bf16[16,256], index: 5, kind: output, shape index: {}]
  %s6 = sld [smem:[#allocation0]]
  $region61: #{patch_embedding.1} parent=0
    _
  %s8 = ssub.s32 1, %s6
  %s9 = scalar_select 0, %s8, %s6
  $region1: #{patch_embedding.1} parent=0
    #allocation3 [shape = 'u8[8192]{0}', space=vmem, size = 0x2000, scoped, tag = 'output window, operand 0']
    #allocation4 [shape = 's32[2]{0}', space=sflag, size = 0x8, scoped, tag = 'scoped memory for patch_embedding.1']
    %10 = vsyncpa [#allocation4], 0
    %s11 = scalar_lea.sflag [#allocation4], 1
    %12 = vsyncpa %s11, 0
    loop: start=0, step=1, limit=4
    $region2: #{patch_embedding.1} parent=1 // loop_pre_header
      _
    $region3: #{patch_embedding.1} parent=1 // loop_header
      %s14 = sphi 0, %s18
      %p15 = scmp.ge.s32.totalorder %s14, 4
      %s21 = sphi 0, %s33
      %s22 = sphi 0, %s29
      %s23 = sphi 0, %s21
      %s24 = sphi 0, %s22
      %s25 = sphi 0, %s23
      %s26 = sphi 0, %s24
      %s38 = sphi 0, %s40
      %s41 = sphi 0, %s38
      %s42 = sphi 0, %s41
      %s58 = sphi 0, %s42
      %s64 = sphi 0, %s66
      %s67 = sphi 0, %s64
      %s68 = sphi 0, %s67
      %s84 = sphi 0, %s68
      %s88 = sphi 0, %s88
      %s90 = sphi 0, %s88
      %s91 = sphi 0, %s90
      %s105 = sphi 0, %s91
      %s109 = sphi 0, %s109
      %s111 = sphi 0, %s109
      %s112 = sphi 0, %s111
      %s126 = sphi 0, %s112
      %s130 = sphi 0, %s130
      %s132 = sphi 0, %s130
      %s133 = sphi 0, %s132
      %s147 = sphi 0, %s133
      %s153 = sphi 0, %s155
      %s156 = sphi 0, %s153
      %s157 = sphi 0, %s156
      %s173 = sphi 0, %s157
    $region4: #{patch_embedding.1} parent=1 // loop_header_branch
      %17 = sbr.rel (%p15) target = $region8
    $region5: #{patch_embedding.1} parent=1 // loop_body
      %s19 = ssub.s32 %s14, 1
      %s20 = ssub.s32 %s14, 2
      %s27 = sadd.s32 1, %s22
      %p28 = scmp.ge.s32.totalorder %s27, 1
      %s29 = scalar_select %p28, 0, %s27
      %s30 = sadd.s32 1, %s21
      %s31 = scalar_select %p28, %s30, %s21
      %p32 = scmp.ge.s32.totalorder %s31, 2
      %s33 = scalar_select %p32, 0, %s31
      %s34 = ssub.s32 %s21, %s33
      %s35 = ssub.s32 %s22, %s29
      %s36 = sor.u32 %s34, %s35
      %p37 = scmp.eq.s32.totalorder %s36, 0
      %s39 = sadd.s32 %s38, 1
      %s40 = scalar_select %p37, %s38, %s39
      %p43 = pneg %p37
      %p44 = scmp.eq.s32.totalorder %s14, 1
      %p45 = por %p43, %p44
      %p46 = scmp.ne.s32.totalorder %s38, %s41
      %p47 = scmp.eq.s32.totalorder %s14, 0
      %p48 = por %p46, %p47
      %p49 = scmp.ne.s32.totalorder %s38, %s41
      %p50 = scmp.eq.s32.totalorder %s19, 1
      %p51 = por %p49, %p50
      %p52 = scmp.ne.s32.totalorder %s41, %s42
      %p53 = scmp.eq.s32.totalorder %s19, 0
      %p54 = por %p52, %p53
      %p55 = scmp.ne.s32.totalorder %s41, %s42
      %p56 = scmp.eq.s32.totalorder %s20, 1
      %p57 = por %p55, %p56
      %p59 = scmp.ne.s32.totalorder %s42, %s58
      %p60 = scmp.eq.s32.totalorder %s20, 0
      %p61 = por %p59, %p60
      %s62 = ssub.s32 %s22, %s29
      %p63 = scmp.eq.s32.totalorder %s62, 0
      %s65 = sadd.s32 %s64, 1
      %s66 = scalar_select %p63, %s64, %s65
      %p69 = pneg %p63
      %p70 = scmp.eq.s32.totalorder %s14, 1
      %p71 = por %p69, %p70
      %p72 = scmp.ne.s32.totalorder %s64, %s67
      %p73 = scmp.eq.s32.totalorder %s14, 0
      %p74 = por %p72, %p73
      %p75 = scmp.ne.s32.totalorder %s64, %s67
      %p76 = scmp.eq.s32.totalorder %s19, 1
      %p77 = por %p75, %p76
      %p78 = scmp.ne.s32.totalorder %s67, %s68
      %p79 = scmp.eq.s32.totalorder %s19, 0
      %p80 = por %p78, %p79
      %p81 = scmp.ne.s32.totalorder %s67, %s68
      %p82 = scmp.eq.s32.totalorder %s20, 1
      %p83 = por %p81, %p82
      %p85 = scmp.ne.s32.totalorder %s68, %s84
      %p86 = scmp.eq.s32.totalorder %s20, 0
      %p87 = por %p85, %p86
      %s89 = sadd.s32 %s88, 1
      %p92 = scmp.eq.s32.totalorder %s14, 1
      %p93 = scmp.ne.s32.totalorder %s88, %s90
      %p94 = scmp.eq.s32.totalorder %s14, 0
      %p95 = por %p93, %p94
      %p96 = scmp.ne.s32.totalorder %s88, %s90
      %p97 = scmp.eq.s32.totalorder %s19, 1
      %p98 = por %p96, %p97
      %p99 = scmp.ne.s32.totalorder %s90, %s91
      %p100 = scmp.eq.s32.totalorder %s19, 0
      %p101 = por %p99, %p100
      %p102 = scmp.ne.s32.totalorder %s90, %s91
      %p103 = scmp.eq.s32.totalorder %s20, 1
      %p104 = por %p102, %p103
      %p106 = scmp.ne.s32.totalorder %s91, %s105
      %p107 = scmp.eq.s32.totalorder %s20, 0
      %p108 = por %p106, %p107
      %s110 = sadd.s32 %s109, 1
      %p113 = scmp.eq.s32.totalorder %s14, 1
      %p114 = scmp.ne.s32.totalorder %s109, %s111
      %p115 = scmp.eq.s32.totalorder %s14, 0
      %p116 = por %p114, %p115
      %p117 = scmp.ne.s32.totalorder %s109, %s111
      %p118 = scmp.eq.s32.totalorder %s19, 1
      %p119 = por %p117, %p118
      %p120 = scmp.ne.s32.totalorder %s111, %s112
      %p121 = scmp.eq.s32.totalorder %s19, 0
      %p122 = por %p120, %p121
      %p123 = scmp.ne.s32.totalorder %s111, %s112
      %p124 = scmp.eq.s32.totalorder %s20, 1
      %p125 = por %p123, %p124
      %p127 = scmp.ne.s32.totalorder %s112, %s126
      %p128 = scmp.eq.s32.totalorder %s20, 0
      %p129 = por %p127, %p128
      %s131 = sadd.s32 %s130, 1
      %p134 = scmp.eq.s32.totalorder %s14, 1
      %p135 = scmp.ne.s32.totalorder %s130, %s132
      %p136 = scmp.eq.s32.totalorder %s14, 0
      %p137 = por %p135, %p136
      %p138 = scmp.ne.s32.totalorder %s130, %s132
      %p139 = scmp.eq.s32.totalorder %s19, 1
      %p140 = por %p138, %p139
      %p141 = scmp.ne.s32.totalorder %s132, %s133
      %p142 = scmp.eq.s32.totalorder %s19, 0
      %p143 = por %p141, %p142
      %p144 = scmp.ne.s32.totalorder %s132, %s133
      %p145 = scmp.eq.s32.totalorder %s20, 1
      %p146 = por %p144, %p145
      %p148 = scmp.ne.s32.totalorder %s133, %s147
      %p149 = scmp.eq.s32.totalorder %s20, 0
      %p150 = por %p148, %p149
      %s151 = ssub.s32 %s21, %s33
      %p152 = scmp.eq.s32.totalorder %s151, 0
      %s154 = sadd.s32 %s153, 1
      %s155 = scalar_select %p152, %s153, %s154
      %p158 = pneg %p152
      %p159 = scmp.eq.s32.totalorder %s14, 1
      %p160 = por %p158, %p159
      %p161 = scmp.ne.s32.totalorder %s153, %s156
      %p162 = scmp.eq.s32.totalorder %s14, 0
      %p163 = por %p161, %p162
      %p164 = scmp.ne.s32.totalorder %s153, %s156
      %p165 = scmp.eq.s32.totalorder %s19, 1
      %p166 = por %p164, %p165
      %p167 = scmp.ne.s32.totalorder %s156, %s157
      %p168 = scmp.eq.s32.totalorder %s19, 0
      %p169 = por %p167, %p168
      %p170 = scmp.ne.s32.totalorder %s156, %s157
      %p171 = scmp.eq.s32.totalorder %s20, 1
      %p172 = por %p170, %p171
      %p174 = scmp.ne.s32.totalorder %s157, %s173
      %p175 = scmp.eq.s32.totalorder %s20, 0
      %p176 = por %p174, %p175
      %p177 = scmp.le.s32.totalorder 1, %s14
      %p178 = scmp.lt.s32.totalorder %s14, 3
      %p179 = pnand %p177, %p178
      %p180 = pneg %p179
      // Predicated region
      $region9: #{patch_embedding.1} parent=5 // pred_check
        _
      $region10: #{patch_embedding.1} parent=5 // pred_check_branch
        %182 = sbr.rel (%p179) target = $region12
      $region11: #{patch_embedding.1} parent=5 // pred_region
        %s183 = ssub.s32 %s14, 1
        // Predicated region
        $region13: #{patch_embedding.1} parent=11 // pred_check
          %p184 = pneg %p80
        $region14: #{patch_embedding.1} parent=11 // pred_check_branch
          %186 = sbr.rel (%p184) target = $region16
        $region15: #{patch_embedding.1} parent=11 // pred_region
          %s187 = smul.u32 112, %s24
          %p188 = scmp.lt.s32.totalorder %s187, 111
          %s189 = scalar_select %p188, %s187, 111
          %s190 = smul.addr %s189, 2
          %s191 = smul.addr %s190, 4
          %s192 = scalar_lea.vmem %s1, %s191
          %s193 = smul.u32 112, %s24
        $region16: #{patch_embedding.1} parent=11 // pred_fallthru
          _
        // Predicated region
        $region17: #{patch_embedding.1} parent=11 // pred_check
          %p194 = pneg %p101
        $region18: #{patch_embedding.1} parent=11 // pred_check_branch
          %196 = sbr.rel (%p194) target = $region20
        $region19: #{patch_embedding.1} parent=11 // pred_region
          _
        $region20: #{patch_embedding.1} parent=11 // pred_fallthru
          _
        // Predicated region
        $region21: #{patch_embedding.1} parent=11 // pred_check
          %p197 = pneg %p122
        $region22: #{patch_embedding.1} parent=11 // pred_check_branch
          %199 = sbr.rel (%p197) target = $region24
        $region23: #{patch_embedding.1} parent=11 // pred_region
          _
        $region24: #{patch_embedding.1} parent=11 // pred_fallthru
          _
        // Predicated region
        $region25: #{patch_embedding.1} parent=11 // pred_check
          %p200 = pneg %p143
        $region26: #{patch_embedding.1} parent=11 // pred_check_branch
          %202 = sbr.rel (%p200) target = $region28
        $region27: #{patch_embedding.1} parent=11 // pred_region
          _
        $region28: #{patch_embedding.1} parent=11 // pred_fallthru
          _
      $region12: #{patch_embedding.1} parent=5 // pred_fallthru
        _
      %p203 = scmp.lt.s32.totalorder %s14, 2
      // Predicated region
      $region29: #{patch_embedding.1} parent=5 // pred_check
        %p204 = pneg %p203
      $region30: #{patch_embedding.1} parent=5 // pred_check_branch
        %206 = sbr.rel (%p204) target = $region32
      $region31: #{patch_embedding.1} parent=5 // pred_region
        // Predicated region
        $region33: #{patch_embedding.1} parent=31 // pred_check
          %p207 = pneg %p48
        $region34: #{patch_embedding.1} parent=31 // pred_check_branch
          %209 = sbr.rel (%p207) target = $region36
        $region35: #{patch_embedding.1} parent=31 // pred_region
          %s210 = smul.u32 7, %s22
          %p211 = scmp.lt.s32.totalorder %s21, 1
          %s212 = scalar_select %p211, %s21, 1
          %p213 = scmp.lt.s32.totalorder %s210, 6
          %s214 = scalar_select %p213, %s210, 6
          %s215 = smul.addr %s212, 7
          %s216 = sadd.s32 %s214, %s215
          %s217 = smul.addr %s216, 4
          %s218 = scalar_lea.vmem %s0, %s217
          %s219 = smul.u32 7, %s22
        $region36: #{patch_embedding.1} parent=31 // pred_fallthru
          _
      $region32: #{patch_embedding.1} parent=5 // pred_fallthru
        _
      %p220 = scmp.le.s32.totalorder 1, %s14
      %p221 = scmp.lt.s32.totalorder %s14, 3
      %p222 = pnand %p220, %p221
      %p223 = pneg %p222
      // Predicated region
      $region37: #{patch_embedding.1} parent=5 // pred_check
        _
      $region38: #{patch_embedding.1} parent=5 // pred_check_branch
        %225 = sbr.rel (%p222) target = $region40
      $region39: #{patch_embedding.1} parent=5 // pred_region
        %s226 = ssub.s32 %s14, 1
        %s227 = smul.u32 7, %s24
        %p228 = scmp.lt.s32.totalorder %s23, 1
        %s229 = scalar_select %p228, %s23, 1
        %p230 = scmp.lt.s32.totalorder %s227, 6
        %s231 = scalar_select %p230, %s227, 6
        %s232 = smul.addr %s229, 7
        %s233 = sadd.s32 %s231, %s232
        %s234 = smul.addr %s233, 4
        %s235 = scalar_lea.vmem %s0, %s234
        %p236 = pneg %p54
        %p237 = pneg %p51
        %s238 = smul.u32 112, %s24
        %p239 = scmp.lt.s32.totalorder %s238, 111
        %s240 = scalar_select %p239, %s238, 111
        %s241 = smul.addr %s240, 2
        %s242 = smul.addr %s241, 4
        %s243 = scalar_lea.vmem %s1, %s242
        %p244 = pneg %p80
        %p245 = pneg %p77
        %p246 = pneg %p101
        %p247 = pneg %p98
        %p248 = pneg %p122
        %p249 = pneg %p119
        %p250 = pneg %p143
        %p251 = pneg %p140
        %p252 = pneg %p169
        %p253 = pneg %p166
        %s254 = sand.u32 %s156, 1
        %s255 = scalar_lea.sflag [#allocation4], %s254
        %s256 = sand.u32 %s156, 1
        %s257 = smul.addr %s256, 8
        %s258 = scalar_lea.vmem [#allocation3], %s257
        %s259 = smul.u32 7, %s24
        %p260 = scmp.lt.s32.totalorder %s23, 1
        %s261 = scalar_select %p260, %s23, 1
        %p262 = scmp.lt.s32.totalorder %s259, 6
        %s263 = scalar_select %p262, %s259, 6
        %s264 = smul.addr %s261, 7
        %s265 = sadd.s32 %s263, %s264
        %s266 = smul.addr %s265, 4
        %s267 = scalar_lea.vmem %s0, %s266
        %s268 = smul.u32 7, %s24
        %s269 = smul.u32 112, %s24
        %p270 = scmp.lt.s32.totalorder %s269, 111
        %s271 = scalar_select %p270, %s269, 111
        %s272 = smul.addr %s271, 2
        %s273 = smul.addr %s272, 4
        %s274 = scalar_lea.vmem %s1, %s273
        %s275 = smul.u32 112, %s24
        %p277 = scmp.eq.s32.totalorder %s24, 0
        // Predicated region
        $region41: #{patch_embedding.1} parent=39 // pred_check
          %p278 = pneg %p277
        $region42: #{patch_embedding.1} parent=39 // pred_check_branch
          %280 = sbr.rel (%p278) target = $region44
        $region43: #{patch_embedding.1} parent=39 // pred_region
          %281 = vst [vmem:[#allocation2] sm:$0xff] 0.0
          %282 = vst [vmem:[#allocation2 + $0x8] sm:$0xff] 0.0
        $region44: #{patch_embedding.1} parent=39 // pred_fallthru
          _
        %v283 = vld [vmem:[#allocation2] sm:$0xff]
        %v284 = vld [vmem:[#allocation2 + $0x8] sm:$0xff]
        %v285 = vld [vmem:[%s267] sm:$0xff]
        %v286 = vld [vmem:[%s267 + $0x8] sm:$0xff]
        %v287 = vld [vmem:[%s267 + $0x10] sm:$0xff]
        %v288 = vld [vmem:[%s267 + $0x18] sm:$0xf]
        %v289 = vld [vmem:[%s274] sm:$0xff]
        %v290 = vld [vmem:[%s274 + $0x8] sm:$0xff]
        %v291 = vld [vmem:[%s274 + $0x10] sm:$0xff]
        %v292 = vld [vmem:[%s274 + $0x18] sm:$0xff]
        %v293 = vld [vmem:[%s274 + $0x20] sm:$0xff]
        %v294 = vld [vmem:[%s274 + $0x28] sm:$0xff]
        %v295 = vld [vmem:[%s274 + $0x30] sm:$0xff]
        %v296 = vld [vmem:[%s274 + $0x38] sm:$0xff]
        %v297 = vld [vmem:[%s274 + $0x40] sm:$0xff]
        %v298 = vld [vmem:[%s274 + $0x48] sm:$0xff]
        %v299 = vld [vmem:[%s274 + $0x50] sm:$0xff]
        %v300 = vld [vmem:[%s274 + $0x58] sm:$0xff]
        %v301 = vld [vmem:[%s274 + $0x60] sm:$0xff]
        %v302 = vld [vmem:[%s274 + $0x68] sm:$0xff]
        %v303 = vld [vmem:[%s274 + $0x70] sm:$0xff]
        %v304 = vld [vmem:[%s274 + $0x78] sm:$0xff]
        %v305 = vld [vmem:[%s274 + $0x80] sm:$0xff]
        %v306 = vld [vmem:[%s274 + $0x88] sm:$0xff]
        %v307 = vld [vmem:[%s274 + $0x90] sm:$0xff]
        %v308 = vld [vmem:[%s274 + $0x98] sm:$0xff]
        %v309 = vld [vmem:[%s274 + $0xa0] sm:$0xff]
        %v310 = vld [vmem:[%s274 + $0xa8] sm:$0xff]
        %v311 = vld [vmem:[%s274 + $0xb0] sm:$0xff]
        %v312 = vld [vmem:[%s274 + $0xb8] sm:$0xff]
        %v313 = vld [vmem:[%s274 + $0xc0] sm:$0xff]
        %v314 = vld [vmem:[%s274 + $0xc8] sm:$0xff]
        %v315 = vld [vmem:[%s274 + $0xd0] sm:$0xff]
        %v316 = vld [vmem:[%s274 + $0xd8] sm:$0xff]
        %v317 = vld [vmem:[%s274 + $0xe0] sm:$0xff]
        %v318 = vld [vmem:[%s274 + $0xe8] sm:$0xff]
        %v319 = vld [vmem:[%s274 + $0xf0] sm:$0xff]
        %v320 = vld [vmem:[%s274 + $0xf8] sm:$0xff]
        %v321 = vld [vmem:[%s274 + $0x100] sm:$0xff]
        %v322 = vld [vmem:[%s274 + $0x108] sm:$0xff]
        %v323 = vld [vmem:[%s274 + $0x110] sm:$0xff]
        %v324 = vld [vmem:[%s274 + $0x118] sm:$0xff]
        %v325 = vld [vmem:[%s274 + $0x120] sm:$0xff]
        %v326 = vld [vmem:[%s274 + $0x128] sm:$0xff]
        %v327 = vld [vmem:[%s274 + $0x130] sm:$0xff]
        %v328 = vld [vmem:[%s274 + $0x138] sm:$0xff]
        %v329 = vld [vmem:[%s274 + $0x140] sm:$0xff]
        %v330 = vld [vmem:[%s274 + $0x148] sm:$0xff]
        %v331 = vld [vmem:[%s274 + $0x150] sm:$0xff]
        %v332 = vld [vmem:[%s274 + $0x158] sm:$0xff]
        %v333 = vld [vmem:[%s274 + $0x160] sm:$0xff]
        %v334 = vld [vmem:[%s274 + $0x168] sm:$0xff]
        %v335 = vld [vmem:[%s274 + $0x170] sm:$0xff]
        %v336 = vld [vmem:[%s274 + $0x178] sm:$0xff]
        %v337 = vld [vmem:[%s274 + $0x180] sm:$0xff]
        %v338 = vld [vmem:[%s274 + $0x188] sm:$0xff]
        %v339 = vld [vmem:[%s274 + $0x190] sm:$0xff]
        %v340 = vld [vmem:[%s274 + $0x198] sm:$0xff]
        %v341 = vld [vmem:[%s274 + $0x1a0] sm:$0xff]
        %v342 = vld [vmem:[%s274 + $0x1a8] sm:$0xff]
        %v343 = vld [vmem:[%s274 + $0x1b0] sm:$0xff]
        %v344 = vld [vmem:[%s274 + $0x1b8] sm:$0xff]
        %v345 = vld [vmem:[%s274 + $0x1c0] sm:$0xff]
        %v346 = vld [vmem:[%s274 + $0x1c8] sm:$0xff]
        %v347 = vld [vmem:[%s274 + $0x1d0] sm:$0xff]
        %v348 = vld [vmem:[%s274 + $0x1d8] sm:$0xff]
        %v349 = vld [vmem:[%s274 + $0x1e0] sm:$0xff]
        %v350 = vld [vmem:[%s274 + $0x1e8] sm:$0xff]
        %v351 = vld [vmem:[%s274 + $0x1f0] sm:$0xff]
        %v352 = vld [vmem:[%s274 + $0x1f8] sm:$0xff]
        %v353 = vld [vmem:[%s274 + $0x200] sm:$0xff]
        %v354 = vld [vmem:[%s274 + $0x208] sm:$0xff]
        %v355 = vld [vmem:[%s274 + $0x210] sm:$0xff]
        %v356 = vld [vmem:[%s274 + $0x218] sm:$0xff]
        %v357 = vld [vmem:[%s274 + $0x220] sm:$0xff]
        %v358 = vld [vmem:[%s274 + $0x228] sm:$0xff]
        %v359 = vld [vmem:[%s274 + $0x230] sm:$0xff]
        %v360 = vld [vmem:[%s274 + $0x238] sm:$0xff]
        %v361 = vld [vmem:[%s274 + $0x240] sm:$0xff]
        %v362 = vld [vmem:[%s274 + $0x248] sm:$0xff]
        %v363 = vld [vmem:[%s274 + $0x250] sm:$0xff]
        %v364 = vld [vmem:[%s274 + $0x258] sm:$0xff]
        %v365 = vld [vmem:[%s274 + $0x260] sm:$0xff]
        %v366 = vld [vmem:[%s274 + $0x268] sm:$0xff]
        %v367 = vld [vmem:[%s274 + $0x270] sm:$0xff]
        %v368 = vld [vmem:[%s274 + $0x278] sm:$0xff]
        %v369 = vld [vmem:[%s274 + $0x280] sm:$0xff]
        %v370 = vld [vmem:[%s274 + $0x288] sm:$0xff]
        %v371 = vld [vmem:[%s274 + $0x290] sm:$0xff]
        %v372 = vld [vmem:[%s274 + $0x298] sm:$0xff]
        %v373 = vld [vmem:[%s274 + $0x2a0] sm:$0xff]
        %v374 = vld [vmem:[%s274 + $0x2a8] sm:$0xff]
        %v375 = vld [vmem:[%s274 + $0x2b0] sm:$0xff]
        %v376 = vld [vmem:[%s274 + $0x2b8] sm:$0xff]
        %v377 = vld [vmem:[%s274 + $0x2c0] sm:$0xff]
        %v378 = vld [vmem:[%s274 + $0x2c8] sm:$0xff]
        %v379 = vld [vmem:[%s274 + $0x2d0] sm:$0xff]
        %v380 = vld [vmem:[%s274 + $0x2d8] sm:$0xff]
        %v381 = vld [vmem:[%s274 + $0x2e0] sm:$0xff]
        %v382 = vld [vmem:[%s274 + $0x2e8] sm:$0xff]
        %v383 = vld [vmem:[%s274 + $0x2f0] sm:$0xff]
        %v384 = vld [vmem:[%s274 + $0x2f8] sm:$0xff]
        %v385 = vld [vmem:[%s274 + $0x300] sm:$0xff]
        %v386 = vld [vmem:[%s274 + $0x308] sm:$0xff]
        %v387 = vld [vmem:[%s274 + $0x310] sm:$0xff]
        %v388 = vld [vmem:[%s274 + $0x318] sm:$0xff]
        %v389 = vld [vmem:[%s274 + $0x320] sm:$0xff]
        %v390 = vld [vmem:[%s274 + $0x328] sm:$0xff]
        %v391 = vld [vmem:[%s274 + $0x330] sm:$0xff]
        %v392 = vld [vmem:[%s274 + $0x338] sm:$0xff]
        %v393 = vld [vmem:[%s274 + $0x340] sm:$0xff]
        %v394 = vld [vmem:[%s274 + $0x348] sm:$0xff]
        %v395 = vld [vmem:[%s274 + $0x350] sm:$0xff]
        %v396 = vld [vmem:[%s274 + $0x358] sm:$0xff]
        %v397 = vld [vmem:[%s274 + $0x360] sm:$0xff]
        %v398 = vld [vmem:[%s274 + $0x368] sm:$0xff]
        %v399 = vld [vmem:[%s274 + $0x370] sm:$0xff]
        %v400 = vld [vmem:[%s274 + $0x378] sm:$0xff]
        %v405 = vunpack.c.l.b16 %v285
        %v406 = vunpack.c.h.b16 %v285
        %v407 = vunpack.c.l.b16 %v286
        %v408 = vunpack.c.h.b16 %v286
        %v409 = vunpack.c.l.b16 %v287
        %v410 = vunpack.c.h.b16 %v287
        %v411 = vunpack.c.l.b16 %v288
        %v412 = vpack.c.b16 %v405, %v405
        %v413 = vpack.c.b16 %v406, %v406
        %v414 = vpack.c.b16 %v407, %v407
        %v415 = vpack.c.b16 %v408, %v408
        %v416 = vpack.c.b16 %v409, %v409
        %v417 = vpack.c.b16 %v410, %v410
        %v418 = vpack.c.b16 %v411, %v411
        %v538 = vunpack.c.l.b16 %v289
        %v539 = vunpack.c.h.b16 %v289
        %v540 = vunpack.c.l.b16 %v290
        %v541 = vunpack.c.h.b16 %v290
        %v542 = vunpack.c.l.b16 %v291
        %v543 = vunpack.c.h.b16 %v291
        %v544 = vunpack.c.l.b16 %v292
        %v545 = vunpack.c.h.b16 %v292
        %v546 = vunpack.c.l.b16 %v293
        %v547 = vunpack.c.h.b16 %v293
        %v548 = vunpack.c.l.b16 %v294
        %v549 = vunpack.c.h.b16 %v294
        %v550 = vunpack.c.l.b16 %v295
        %v551 = vunpack.c.h.b16 %v295
        %v552 = vunpack.c.l.b16 %v296
        %v553 = vunpack.c.h.b16 %v296
        %v554 = vunpack.c.l.b16 %v297
        %v555 = vunpack.c.h.b16 %v297
        %v556 = vunpack.c.l.b16 %v298
        %v557 = vunpack.c.h.b16 %v298
        %v558 = vunpack.c.l.b16 %v299
        %v559 = vunpack.c.h.b16 %v299
        %v560 = vunpack.c.l.b16 %v300
        %v561 = vunpack.c.h.b16 %v300
        %v562 = vunpack.c.l.b16 %v301
        %v563 = vunpack.c.h.b16 %v301
        %v564 = vunpack.c.l.b16 %v302
        %v565 = vunpack.c.h.b16 %v302
        %v566 = vunpack.c.l.b16 %v303
        %v567 = vunpack.c.h.b16 %v303
        %v568 = vunpack.c.l.b16 %v304
        %v569 = vunpack.c.h.b16 %v304
        %v570 = vunpack.c.l.b16 %v305
        %v571 = vunpack.c.h.b16 %v305
        %v572 = vunpack.c.l.b16 %v306
        %v573 = vunpack.c.h.b16 %v306
        %v574 = vunpack.c.l.b16 %v307
        %v575 = vunpack.c.h.b16 %v307
        %v576 = vunpack.c.l.b16 %v308
        %v577 = vunpack.c.h.b16 %v308
        %v578 = vunpack.c.l.b16 %v309
        %v579 = vunpack.c.h.b16 %v309
        %v580 = vunpack.c.l.b16 %v310
        %v581 = vunpack.c.h.b16 %v310
        %v582 = vunpack.c.l.b16 %v311
        %v583 = vunpack.c.h.b16 %v311
        %v584 = vunpack.c.l.b16 %v312
        %v585 = vunpack.c.h.b16 %v312
        %v586 = vunpack.c.l.b16 %v313
        %v587 = vunpack.c.h.b16 %v313
        %v588 = vunpack.c.l.b16 %v314
        %v589 = vunpack.c.h.b16 %v314
        %v590 = vunpack.c.l.b16 %v315
        %v591 = vunpack.c.h.b16 %v315
        %v592 = vunpack.c.l.b16 %v316
        %v593 = vunpack.c.h.b16 %v316
        %v594 = vunpack.c.l.b16 %v317
        %v595 = vunpack.c.h.b16 %v317
        %v596 = vunpack.c.l.b16 %v318
        %v597 = vunpack.c.h.b16 %v318
        %v598 = vunpack.c.l.b16 %v319
        %v599 = vunpack.c.h.b16 %v319
        %v600 = vunpack.c.l.b16 %v320
        %v601 = vunpack.c.h.b16 %v320
        %v602 = vunpack.c.l.b16 %v321
        %v603 = vunpack.c.h.b16 %v321
        %v604 = vunpack.c.l.b16 %v322
        %v605 = vunpack.c.h.b16 %v322
        %v606 = vunpack.c.l.b16 %v323
        %v607 = vunpack.c.h.b16 %v323
        %v608 = vunpack.c.l.b16 %v324
        %v609 = vunpack.c.h.b16 %v324
        %v610 = vunpack.c.l.b16 %v325
        %v611 = vunpack.c.h.b16 %v325
        %v612 = vunpack.c.l.b16 %v326
        %v613 = vunpack.c.h.b16 %v326
        %v614 = vunpack.c.l.b16 %v327
        %v615 = vunpack.c.h.b16 %v327
        %v616 = vunpack.c.l.b16 %v328
        %v617 = vunpack.c.h.b16 %v328
        %v618 = vunpack.c.l.b16 %v329
        %v619 = vunpack.c.h.b16 %v329
        %v620 = vunpack.c.l.b16 %v330
        %v621 = vunpack.c.h.b16 %v330
        %v622 = vunpack.c.l.b16 %v331
        %v623 = vunpack.c.h.b16 %v331
        %v624 = vunpack.c.l.b16 %v332
        %v625 = vunpack.c.h.b16 %v332
        %v626 = vunpack.c.l.b16 %v333
        %v627 = vunpack.c.h.b16 %v333
        %v628 = vunpack.c.l.b16 %v334
        %v629 = vunpack.c.h.b16 %v334
        %v630 = vunpack.c.l.b16 %v335
        %v631 = vunpack.c.h.b16 %v335
        %v632 = vunpack.c.l.b16 %v336
        %v633 = vunpack.c.h.b16 %v336
        %v634 = vunpack.c.l.b16 %v337
        %v635 = vunpack.c.h.b16 %v337
        %v636 = vunpack.c.l.b16 %v338
        %v637 = vunpack.c.h.b16 %v338
        %v638 = vunpack.c.l.b16 %v339
        %v639 = vunpack.c.h.b16 %v339
        %v640 = vunpack.c.l.b16 %v340
        %v641 = vunpack.c.h.b16 %v340
        %v642 = vunpack.c.l.b16 %v341
        %v643 = vunpack.c.h.b16 %v341
        %v644 = vunpack.c.l.b16 %v342
        %v645 = vunpack.c.h.b16 %v342
        %v646 = vunpack.c.l.b16 %v343
        %v647 = vunpack.c.h.b16 %v343
        %v648 = vunpack.c.l.b16 %v344
        %v649 = vunpack.c.h.b16 %v344
        %v650 = vunpack.c.l.b16 %v345
        %v651 = vunpack.c.h.b16 %v345
        %v652 = vunpack.c.l.b16 %v346
        %v653 = vunpack.c.h.b16 %v346
        %v654 = vunpack.c.l.b16 %v347
        %v655 = vunpack.c.h.b16 %v347
        %v656 = vunpack.c.l.b16 %v348
        %v657 = vunpack.c.h.b16 %v348
        %v658 = vunpack.c.l.b16 %v349
        %v659 = vunpack.c.h.b16 %v349
        %v660 = vunpack.c.l.b16 %v350
        %v661 = vunpack.c.h.b16 %v350
        %v662 = vunpack.c.l.b16 %v351
        %v663 = vunpack.c.h.b16 %v351
        %v664 = vunpack.c.l.b16 %v352
        %v665 = vunpack.c.h.b16 %v352
        %v666 = vunpack.c.l.b16 %v353
        %v667 = vunpack.c.h.b16 %v353
        %v668 = vunpack.c.l.b16 %v354
        %v669 = vunpack.c.h.b16 %v354
        %v670 = vunpack.c.l.b16 %v355
        %v671 = vunpack.c.h.b16 %v355
        %v672 = vunpack.c.l.b16 %v356
        %v673 = vunpack.c.h.b16 %v356
        %v674 = vunpack.c.l.b16 %v357
        %v675 = vunpack.c.h.b16 %v357
        %v676 = vunpack.c.l.b16 %v358
        %v677 = vunpack.c.h.b16 %v358
        %v678 = vunpack.c.l.b16 %v359
        %v679 = vunpack.c.h.b16 %v359
        %v680 = vunpack.c.l.b16 %v360
        %v681 = vunpack.c.h.b16 %v360
        %v682 = vunpack.c.l.b16 %v361
        %v683 = vunpack.c.h.b16 %v361
        %v684 = vunpack.c.l.b16 %v362
        %v685 = vunpack.c.h.b16 %v362
        %v686 = vunpack.c.l.b16 %v363
        %v687 = vunpack.c.h.b16 %v363
        %v688 = vunpack.c.l.b16 %v364
        %v689 = vunpack.c.h.b16 %v364
        %v690 = vunpack.c.l.b16 %v365
        %v691 = vunpack.c.h.b16 %v365
        %v692 = vunpack.c.l.b16 %v366
        %v693 = vunpack.c.h.b16 %v366
        %v694 = vunpack.c.l.b16 %v367
        %v695 = vunpack.c.h.b16 %v367
        %v696 = vunpack.c.l.b16 %v368
        %v697 = vunpack.c.h.b16 %v368
        %v698 = vunpack.c.l.b16 %v369
        %v699 = vunpack.c.h.b16 %v369
        %v700 = vunpack.c.l.b16 %v370
        %v701 = vunpack.c.h.b16 %v370
        %v702 = vunpack.c.l.b16 %v371
        %v703 = vunpack.c.h.b16 %v371
        %v704 = vunpack.c.l.b16 %v372
        %v705 = vunpack.c.h.b16 %v372
        %v706 = vunpack.c.l.b16 %v373
        %v707 = vunpack.c.h.b16 %v373
        %v708 = vunpack.c.l.b16 %v374
        %v709 = vunpack.c.h.b16 %v374
        %v710 = vunpack.c.l.b16 %v375
        %v711 = vunpack.c.h.b16 %v375
        %v712 = vunpack.c.l.b16 %v376
        %v713 = vunpack.c.h.b16 %v376
        %v714 = vunpack.c.l.b16 %v377
        %v715 = vunpack.c.h.b16 %v377
        %v716 = vunpack.c.l.b16 %v378
        %v717 = vunpack.c.h.b16 %v378
        %v718 = vunpack.c.l.b16 %v379
        %v719 = vunpack.c.h.b16 %v379
        %v720 = vunpack.c.l.b16 %v380
        %v721 = vunpack.c.h.b16 %v380
        %v722 = vunpack.c.l.b16 %v381
        %v723 = vunpack.c.h.b16 %v381
        %v724 = vunpack.c.l.b16 %v382
        %v725 = vunpack.c.h.b16 %v382
        %v726 = vunpack.c.l.b16 %v383
        %v727 = vunpack.c.h.b16 %v383
        %v728 = vunpack.c.l.b16 %v384
        %v729 = vunpack.c.h.b16 %v384
        %v730 = vunpack.c.l.b16 %v385
        %v731 = vunpack.c.h.b16 %v385
        %v732 = vunpack.c.l.b16 %v386
        %v733 = vunpack.c.h.b16 %v386
        %v734 = vunpack.c.l.b16 %v387
        %v735 = vunpack.c.h.b16 %v387
        %v736 = vunpack.c.l.b16 %v388
        %v737 = vunpack.c.h.b16 %v388
        %v738 = vunpack.c.l.b16 %v389
        %v739 = vunpack.c.h.b16 %v389
        %v740 = vunpack.c.l.b16 %v390
        %v741 = vunpack.c.h.b16 %v390
        %v742 = vunpack.c.l.b16 %v391
        %v743 = vunpack.c.h.b16 %v391
        %v744 = vunpack.c.l.b16 %v392
        %v745 = vunpack.c.h.b16 %v392
        %v746 = vunpack.c.l.b16 %v393
        %v747 = vunpack.c.h.b16 %v393
        %v748 = vunpack.c.l.b16 %v394
        %v749 = vunpack.c.h.b16 %v394
        %v750 = vunpack.c.l.b16 %v395
        %v751 = vunpack.c.h.b16 %v395
        %v752 = vunpack.c.l.b16 %v396
        %v753 = vunpack.c.h.b16 %v396
        %v754 = vunpack.c.l.b16 %v397
        %v755 = vunpack.c.h.b16 %v397
        %v756 = vunpack.c.l.b16 %v398
        %v757 = vunpack.c.h.b16 %v398
        %v758 = vunpack.c.l.b16 %v399
        %v759 = vunpack.c.h.b16 %v399
        %v760 = vunpack.c.l.b16 %v400
        %v761 = vunpack.c.h.b16 %v400
        %v762 = vpack.c.b16 %v540, %v538
        %v763 = vpack.c.b16 %v541, %v539
        %v764 = vpack.c.b16 %v544, %v542
        %v765 = vpack.c.b16 %v545, %v543
        %v766 = vpack.c.b16 %v548, %v546
        %v767 = vpack.c.b16 %v549, %v547
        %v768 = vpack.c.b16 %v552, %v550
        %v769 = vpack.c.b16 %v553, %v551
        %v770 = vpack.c.b16 %v556, %v554
        %v771 = vpack.c.b16 %v557, %v555
        %v772 = vpack.c.b16 %v560, %v558
        %v773 = vpack.c.b16 %v561, %v559
        %v774 = vpack.c.b16 %v564, %v562
        %v775 = vpack.c.b16 %v565, %v563
        %v776 = vpack.c.b16 %v568, %v566
        %v777 = vpack.c.b16 %v569, %v567
        %v778 = vpack.c.b16 %v572, %v570
        %v779 = vpack.c.b16 %v573, %v571
        %v780 = vpack.c.b16 %v576, %v574
        %v781 = vpack.c.b16 %v577, %v575
        %v782 = vpack.c.b16 %v580, %v578
        %v783 = vpack.c.b16 %v581, %v579
        %v784 = vpack.c.b16 %v584, %v582
        %v785 = vpack.c.b16 %v585, %v583
        %v786 = vpack.c.b16 %v588, %v586
        %v787 = vpack.c.b16 %v589, %v587
        %v788 = vpack.c.b16 %v592, %v590
        %v789 = vpack.c.b16 %v593, %v591
        %v790 = vpack.c.b16 %v596, %v594
        %v791 = vpack.c.b16 %v597, %v595
        %v792 = vpack.c.b16 %v600, %v598
        %v793 = vpack.c.b16 %v601, %v599
        %v794 = vpack.c.b16 %v604, %v602
        %v795 = vpack.c.b16 %v605, %v603
        %v796 = vpack.c.b16 %v608, %v606
        %v797 = vpack.c.b16 %v609, %v607
        %v798 = vpack.c.b16 %v612, %v610
        %v799 = vpack.c.b16 %v613, %v611
        %v800 = vpack.c.b16 %v616, %v614
        %v801 = vpack.c.b16 %v617, %v615
        %v802 = vpack.c.b16 %v620, %v618
        %v803 = vpack.c.b16 %v621, %v619
        %v804 = vpack.c.b16 %v624, %v622
        %v805 = vpack.c.b16 %v625, %v623
        %v806 = vpack.c.b16 %v628, %v626
        %v807 = vpack.c.b16 %v629, %v627
        %v808 = vpack.c.b16 %v632, %v630
        %v809 = vpack.c.b16 %v633, %v631
        %v810 = vpack.c.b16 %v636, %v634
        %v811 = vpack.c.b16 %v637, %v635
        %v812 = vpack.c.b16 %v640, %v638
        %v813 = vpack.c.b16 %v641, %v639
        %v814 = vpack.c.b16 %v644, %v642
        %v815 = vpack.c.b16 %v645, %v643
        %v816 = vpack.c.b16 %v648, %v646
        %v817 = vpack.c.b16 %v649, %v647
        %v818 = vpack.c.b16 %v652, %v650
        %v819 = vpack.c.b16 %v653, %v651
        %v820 = vpack.c.b16 %v656, %v654
        %v821 = vpack.c.b16 %v657, %v655
        %v822 = vpack.c.b16 %v660, %v658
        %v823 = vpack.c.b16 %v661, %v659
        %v824 = vpack.c.b16 %v664, %v662
        %v825 = vpack.c.b16 %v665, %v663
        %v826 = vpack.c.b16 %v668, %v666
        %v827 = vpack.c.b16 %v669, %v667
        %v828 = vpack.c.b16 %v672, %v670
        %v829 = vpack.c.b16 %v673, %v671
        %v830 = vpack.c.b16 %v676, %v674
        %v831 = vpack.c.b16 %v677, %v675
        %v832 = vpack.c.b16 %v680, %v678
        %v833 = vpack.c.b16 %v681, %v679
        %v834 = vpack.c.b16 %v684, %v682
        %v835 = vpack.c.b16 %v685, %v683
        %v836 = vpack.c.b16 %v688, %v686
        %v837 = vpack.c.b16 %v689, %v687
        %v838 = vpack.c.b16 %v692, %v690
        %v839 = vpack.c.b16 %v693, %v691
        %v840 = vpack.c.b16 %v696, %v694
        %v841 = vpack.c.b16 %v697, %v695
        %v842 = vpack.c.b16 %v700, %v698
        %v843 = vpack.c.b16 %v701, %v699
        %v844 = vpack.c.b16 %v704, %v702
        %v845 = vpack.c.b16 %v705, %v703
        %v846 = vpack.c.b16 %v708, %v706
        %v847 = vpack.c.b16 %v709, %v707
        %v848 = vpack.c.b16 %v712, %v710
        %v849 = vpack.c.b16 %v713, %v711
        %v850 = vpack.c.b16 %v716, %v714
        %v851 = vpack.c.b16 %v717, %v715
        %v852 = vpack.c.b16 %v720, %v718
        %v853 = vpack.c.b16 %v721, %v719
        %v854 = vpack.c.b16 %v724, %v722
        %v855 = vpack.c.b16 %v725, %v723
        %v856 = vpack.c.b16 %v728, %v726
        %v857 = vpack.c.b16 %v729, %v727
        %v858 = vpack.c.b16 %v732, %v730
        %v859 = vpack.c.b16 %v733, %v731
        %v860 = vpack.c.b16 %v736, %v734
        %v861 = vpack.c.b16 %v737, %v735
        %v862 = vpack.c.b16 %v740, %v738
        %v863 = vpack.c.b16 %v741, %v739
        %v864 = vpack.c.b16 %v744, %v742
        %v865 = vpack.c.b16 %v745, %v743
        %v866 = vpack.c.b16 %v748, %v746
        %v867 = vpack.c.b16 %v749, %v747
        %v868 = vpack.c.b16 %v752, %v750
        %v869 = vpack.c.b16 %v753, %v751
        %v870 = vpack.c.b16 %v756, %v754
        %v871 = vpack.c.b16 %v757, %v755
        %v872 = vpack.c.b16 %v760, %v758
        %v873 = vpack.c.b16 %v761, %v759
        %986 = vmatprep.subr.bf16.mxu0 %v763
        %987 = vmatpush1.bf16.msra.mxu0 %v762
        %988 = vmatprep.subr.bf16.mxu0 %v765
        %989 = vmatpush1.bf16.msra.mxu0 %v764
        %990 = vmatprep.subr.bf16.mxu0 %v767
        %991 = vmatpush1.bf16.msra.mxu0 %v766
        %992 = vmatprep.subr.bf16.mxu0 %v769
        %993 = vmatpush1.bf16.msra.mxu0 %v768
        %994 = vmatprep.subr.bf16.mxu0 %v771
        %995 = vmatpush1.bf16.msra.mxu0 %v770
        %996 = vmatprep.subr.bf16.mxu0 %v773
        %997 = vmatpush1.bf16.msra.mxu0 %v772
        %998 = vmatprep.subr.bf16.mxu0 %v775
        %999 = vmatpush1.bf16.msra.mxu0 %v774
        %1000 = vmatprep.subr.bf16.mxu0 %v777
        %1001 = vmatpush1.bf16.msra.mxu0 %v776
        %1002 = vmatprep.subr.bf16.mxu0 %v779
        %1003 = vmatpush1.bf16.msra.mxu0 %v778
        %1004 = vmatprep.subr.bf16.mxu0 %v781
        %1005 = vmatpush1.bf16.msra.mxu0 %v780
        %1006 = vmatprep.subr.bf16.mxu0 %v783
        %1007 = vmatpush1.bf16.msra.mxu0 %v782
        %1008 = vmatprep.subr.bf16.mxu0 %v785
        %1009 = vmatpush1.bf16.msra.mxu0 %v784
        %1010 = vmatprep.subr.bf16.mxu0 %v787
        %1011 = vmatpush1.bf16.msra.mxu0 %v786
        %1012 = vmatprep.subr.bf16.mxu0 %v789
        %1013 = vmatpush1.bf16.msra.mxu0 %v788
        %1014 = vmatprep.subr.bf16.mxu0 %v791
        %1015 = vmatpush1.bf16.msra.mxu0 %v790
        %1016 = vmatprep.subr.bf16.mxu0 %v793
        %1017 = vmatpush1.bf16.msra.mxu0 %v792
        %1018 = vmatprep.mubr.bf16.mxu0 %v413
        %1019 = vmatmul.mubr.bf16.gmra.mrb[0].mxu0 %v412
        %v1020 = vpop.f32.mrb[0].mxu0
        %v1021 = vadd.f32 0.0, %v1020
        %v1022 = vpop.f32.mrb[0].mxu0
        %v1023 = vadd.f32 0.0, %v1022
        %v1024 = vpop.f32.mrb[0].mxu0
        %v1025 = vpop.f32.mrb[0].mxu0
        %1026 = vdwg.mxu0
        %1027 = vmatprep.subr.bf16.mxu0 %v795
        %1028 = vmatpush1.bf16.msra.mxu0 %v794
        %1029 = vmatprep.subr.bf16.mxu0 %v797
        %1030 = vmatpush1.bf16.msra.mxu0 %v796
        %1031 = vmatprep.subr.bf16.mxu0 %v799
        %1032 = vmatpush1.bf16.msra.mxu0 %v798
        %1033 = vmatprep.subr.bf16.mxu0 %v801
        %1034 = vmatpush1.bf16.msra.mxu0 %v800
        %1035 = vmatprep.subr.bf16.mxu0 %v803
        %1036 = vmatpush1.bf16.msra.mxu0 %v802
        %1037 = vmatprep.subr.bf16.mxu0 %v805
        %1038 = vmatpush1.bf16.msra.mxu0 %v804
        %1039 = vmatprep.subr.bf16.mxu0 %v807
        %1040 = vmatpush1.bf16.msra.mxu0 %v806
        %1041 = vmatprep.subr.bf16.mxu0 %v809
        %1042 = vmatpush1.bf16.msra.mxu0 %v808
        %1043 = vmatprep.subr.bf16.mxu0 %v811
        %1044 = vmatpush1.bf16.msra.mxu0 %v810
        %1045 = vmatprep.subr.bf16.mxu0 %v813
        %1046 = vmatpush1.bf16.msra.mxu0 %v812
        %1047 = vmatprep.subr.bf16.mxu0 %v815
        %1048 = vmatpush1.bf16.msra.mxu0 %v814
        %1049 = vmatprep.subr.bf16.mxu0 %v817
        %1050 = vmatpush1.bf16.msra.mxu0 %v816
        %1051 = vmatprep.subr.bf16.mxu0 %v819
        %1052 = vmatpush1.bf16.msra.mxu0 %v818
        %1053 = vmatprep.subr.bf16.mxu0 %v821
        %1054 = vmatpush1.bf16.msra.mxu0 %v820
        %1055 = vmatprep.subr.bf16.mxu0 %v823
        %1056 = vmatpush1.bf16.msra.mxu0 %v822
        %1057 = vmatprep.subr.bf16.mxu0 %v825
        %1058 = vmatpush1.bf16.msra.mxu0 %v824
        %1059 = vmatprep.mubr.bf16.mxu0 %v415
        %1060 = vmatmul.mubr.bf16.gmra.mrb[0].mxu0 %v414
        %v1061 = vpop.f32.mrb[0].mxu0
        %v1062 = vadd.f32 %v1021, %v1061
        %v1063 = vpop.f32.mrb[0].mxu0
        %v1064 = vadd.f32 %v1023, %v1063
        %v1065 = vpop.f32.mrb[0].mxu0
        %v1066 = vpop.f32.mrb[0].mxu0
        %1067 = vdwg.mxu0
        %1068 = vmatprep.subr.bf16.mxu0 %v827
        %1069 = vmatpush1.bf16.msra.mxu0 %v826
        %1070 = vmatprep.subr.bf16.mxu0 %v829
        %1071 = vmatpush1.bf16.msra.mxu0 %v828
        %1072 = vmatprep.subr.bf16.mxu0 %v831
        %1073 = vmatpush1.bf16.msra.mxu0 %v830
        %1074 = vmatprep.subr.bf16.mxu0 %v833
        %1075 = vmatpush1.bf16.msra.mxu0 %v832
        %1076 = vmatprep.subr.bf16.mxu0 %v835
        %1077 = vmatpush1.bf16.msra.mxu0 %v834
        %1078 = vmatprep.subr.bf16.mxu0 %v837
        %1079 = vmatpush1.bf16.msra.mxu0 %v836
        %1080 = vmatprep.subr.bf16.mxu0 %v839
        %1081 = vmatpush1.bf16.msra.mxu0 %v838
        %1082 = vmatprep.subr.bf16.mxu0 %v841
        %1083 = vmatpush1.bf16.msra.mxu0 %v840
        %1084 = vmatprep.subr.bf16.mxu0 %v843
        %1085 = vmatpush1.bf16.msra.mxu0 %v842
        %1086 = vmatprep.subr.bf16.mxu0 %v845
        %1087 = vmatpush1.bf16.msra.mxu0 %v844
        %1088 = vmatprep.subr.bf16.mxu0 %v847
        %1089 = vmatpush1.bf16.msra.mxu0 %v846
        %1090 = vmatprep.subr.bf16.mxu0 %v849
        %1091 = vmatpush1.bf16.msra.mxu0 %v848
        %1092 = vmatprep.subr.bf16.mxu0 %v851
        %1093 = vmatpush1.bf16.msra.mxu0 %v850
        %1094 = vmatprep.subr.bf16.mxu0 %v853
        %1095 = vmatpush1.bf16.msra.mxu0 %v852
        %1096 = vmatprep.subr.bf16.mxu0 %v855
        %1097 = vmatpush1.bf16.msra.mxu0 %v854
        %1098 = vmatprep.subr.bf16.mxu0 %v857
        %1099 = vmatpush1.bf16.msra.mxu0 %v856
        %1100 = vmatprep.mubr.bf16.mxu0 %v417
        %1101 = vmatmul.mubr.bf16.gmra.mrb[0].mxu0 %v416
        %v1102 = vpop.f32.mrb[0].mxu0
        %v1103 = vadd.f32 %v1062, %v1102
        %v1104 = vpop.f32.mrb[0].mxu0
        %v1105 = vadd.f32 %v1064, %v1104
        %v1106 = vpop.f32.mrb[0].mxu0
        %v1107 = vpop.f32.mrb[0].mxu0
        %1108 = vdwg.mxu0
        %1109 = vmatprep.subr.bf16.mxu0 %v859
        %1110 = vmatpush1.bf16.msra.mxu0 %v858
        %1111 = vmatprep.subr.bf16.mxu0 %v861
        %1112 = vmatpush1.bf16.msra.mxu0 %v860
        %1113 = vmatprep.subr.bf16.mxu0 %v863
        %1114 = vmatpush1.bf16.msra.mxu0 %v862
        %1115 = vmatprep.subr.bf16.mxu0 %v865
        %1116 = vmatpush1.bf16.msra.mxu0 %v864
        %1117 = vmatprep.subr.bf16.mxu0 %v867
        %1118 = vmatpush1.bf16.msra.mxu0 %v866
        %1119 = vmatprep.subr.bf16.mxu0 %v869
        %1120 = vmatpush1.bf16.msra.mxu0 %v868
        %1121 = vmatprep.subr.bf16.mxu0 %v871
        %1122 = vmatpush1.bf16.msra.mxu0 %v870
        %1123 = vmatprep.subr.bf16.mxu0 %v873
        %1124 = vmatpush1.bf16.msra.mxu0 %v872
        %1125 = vmatprep.subr.bf16.mxu0 0
        %1126 = vmatpush1.bf16.msra.mxu0 0
        %1127 = vmatprep.subr.bf16.mxu0 0
        %1128 = vmatpush1.bf16.msra.mxu0 0
        %1129 = vmatprep.subr.bf16.mxu0 0
        %1130 = vmatpush1.bf16.msra.mxu0 0
        %1131 = vmatprep.subr.bf16.mxu0 0
        %1132 = vmatpush1.bf16.msra.mxu0 0
        %1133 = vmatprep.subr.bf16.mxu0 0
        %1134 = vmatpush1.bf16.msra.mxu0 0
        %1135 = vmatprep.subr.bf16.mxu0 0
        %1136 = vmatpush1.bf16.msra.mxu0 0
        %1137 = vmatprep.subr.bf16.mxu0 0
        %1138 = vmatpush1.bf16.msra.mxu0 0
        %1139 = vmatprep.subr.bf16.mxu0 0
        %1140 = vmatpush1.bf16.msra.mxu0 0
        %1141 = vmatprep.mubr.bf16.mxu0 0
        %1142 = vmatmul.mubr.bf16.gmra.mrb[0].mxu0 %v418
        %v1143 = vpop.f32.mrb[0].mxu0
        %v1144 = vadd.f32 %v1103, %v1143
        %v1145 = vpop.f32.mrb[0].mxu0
        %v1146 = vadd.f32 %v1105, %v1145
        %v1147 = vpop.f32.mrb[0].mxu0
        %v1148 = vpop.f32.mrb[0].mxu0
        %1149 = vdwg.mxu0
        %v1150 = vadd.f32 %v283, %v1144
        %v1151 = vadd.f32 %v284, %v1146
        %1152 = vst [vmem:[#allocation2] sm:$0xff] %v1150
        %1153 = vst [vmem:[#allocation2 + $0x8] sm:$0xff] %v1151
        // Predicated region
        $region45: #{patch_embedding.1} parent=39 // pred_check
          %p1154 = pneg %p277
        $region46: #{patch_embedding.1} parent=39 // pred_check_branch
          %1156 = sbr.rel (%p1154) target = $region48
        $region47: #{patch_embedding.1} parent=39 // pred_region
          %v1157 = vld [vmem:[#allocation2] sm:$0xff]
          %v1158 = vld [vmem:[#allocation2 + $0x8] sm:$0xff]
          %v1159 = vld [vmem:[%s2] sm:$0x3]
          %v1161 = vlaneseq
          %v1162 = vshrl.u32 %v1161, 7
          %v1163 = vsub.s32 0, %v1162
          %v1164 = vrot.slane %v1159, %v1163
          %v1165 = vlaneseq
          %v1166 = vshrl.u32 %v1165, 7
          %v1167 = vsub.s32 1, %v1166
          %v1168 = vrot.slane %v1159, %v1167
          %v1171 = vadd.f32 %v1157, %v1164
          %v1172 = vadd.f32 %v1158, %v1168
          %v1173 = vadd.f32 %v1171, %v1172
          %1174 = vadd.xlane.f32.xlu0 %v1173
          %v1175 = vpop.xlane.xlu0 %1174
          %v1176 = vrcp.pop 256.0
          %v1177 = vmul.f32 %v1175, %v1176
          %v1178 = vsub.f32 %v1171, %v1177
          %v1179 = vsub.f32 %v1172, %v1177
          %v1180 = vmul.f32 %v1178, %v1178
          %v1181 = vmul.f32 %v1179, %v1179
          %v1182 = vadd.f32 %v1180, %v1181
          %1183 = vadd.xlane.f32.xlu0 %v1182
          %v1184 = vpop.xlane.xlu0 %1183
          %v1185 = vmul.f32 %v1184, %v1176
          %v1186 = vadd.f32 %v1185, 1e-05
          %v1187 = vrsqrt.pop %v1186
          %v1188 = vld [vmem:[%s3] sm:$0x3]
          %v1190 = vlaneseq
          %v1191 = vshrl.u32 %v1190, 7
          %v1192 = vsub.s32 0, %v1191
          %v1193 = vrot.slane %v1188, %v1192
          %v1194 = vlaneseq
          %v1195 = vshrl.u32 %v1194, 7
          %v1196 = vsub.s32 1, %v1195
          %v1197 = vrot.slane %v1188, %v1196
          %v1200 = vmul.f32 %v1187, %v1193
          %v1201 = vmul.f32 %v1187, %v1197
          %v1202 = vmul.f32 %v1178, %v1200
          %v1203 = vmul.f32 %v1179, %v1201
          %v1204 = vld [vmem:[%s4] sm:$0x3]
          %v1206 = vlaneseq
          %v1207 = vshrl.u32 %v1206, 7
          %v1208 = vsub.s32 0, %v1207
          %v1209 = vrot.slane %v1204, %v1208
          %v1210 = vlaneseq
          %v1211 = vshrl.u32 %v1210, 7
          %v1212 = vsub.s32 1, %v1211
          %v1213 = vrot.slane %v1204, %v1212
          %v1216 = vadd.f32 %v1202, %v1209
          %v1217 = vadd.f32 %v1203, %v1213
          %v1218 = vpack.c.bf16 %v1216, %v1216
          %v1219 = vpack.c.bf16 %v1217, %v1217
          %v1222 = vunpack.c.l.b16 %v1218
          %v1223 = vunpack.c.l.b16 %v1219
          %v1224 = vpack.c.b16 %v1223, %v1222
          %1226 = vst [vmem:[%s258] sm:$0xff] %v1224
        $region48: #{patch_embedding.1} parent=39 // pred_fallthru
          _
        %s1227 = sand.u32 %s156, 1
        %s1228 = scalar_lea.sflag [#allocation4], %s1227
        %s1229 = sand.u32 %s156, 1
        %s1230 = smul.addr %s1229, 8
        %s1231 = scalar_lea.vmem [#allocation3], %s1230
        // Predicated region
        $region49: #{patch_embedding.1} parent=39 // pred_check
          %p1232 = pneg %p166
        $region50: #{patch_embedding.1} parent=39 // pred_check_branch
          %1234 = sbr.rel (%p1232) target = $region52
        $region51: #{patch_embedding.1} parent=39 // pred_region
          %s1236 = ssub.s32 128, 128
          %1237 = vsyncadd %s1228, %s1236
          %s1238 = smul.addr %s23, 2
          %s1239 = smul.addr %s1238, 64
          %s1240 = scalar_lea.hbm %s5, %s1239
          %s1242 = sshll.u32 %s1231, 4
          %s1243 = int_to_ptr.vmem [resolvable:$true] %s1242
          %1245 = dma.vmem_to_hbm [thread:$0]  %s1243, 128, %s1240, %s1228
        $region52: #{patch_embedding.1} parent=39 // pred_fallthru
          _
      $region40: #{patch_embedding.1} parent=5 // pred_fallthru
        _
      %p1246 = scmp.le.s32.totalorder 2, %s14
      // Predicated region
      $region53: #{patch_embedding.1} parent=5 // pred_check
        %p1247 = pneg %p1246
      $region54: #{patch_embedding.1} parent=5 // pred_check_branch
        %1249 = sbr.rel (%p1247) target = $region56
      $region55: #{patch_embedding.1} parent=5 // pred_region
        %s1250 = ssub.s32 %s14, 2
        // Predicated region
        $region57: #{patch_embedding.1} parent=55 // pred_check
          %p1251 = pneg %p172
        $region58: #{patch_embedding.1} parent=55 // pred_check_branch
          %1253 = sbr.rel (%p1251) target = $region60
        $region59: #{patch_embedding.1} parent=55 // pred_region
          %s1254 = sand.u32 %s157, 1
          %s1255 = scalar_lea.sflag [#allocation4], %s1254
          %s1256 = sand.u32 %s157, 1
          %s1257 = smul.addr %s1256, 8
          %s1258 = scalar_lea.vmem [#allocation3], %s1257
          %1259 = dma.done %s1255, 128
        $region60: #{patch_embedding.1} parent=55 // pred_fallthru
          _
      $region56: #{patch_embedding.1} parent=5 // pred_fallthru
        _
    $region6: #{patch_embedding.1} parent=1 // loop_footer
      %s18 = sadd.s32 1, %s14
    $region7: #{patch_embedding.1} parent=1 // loop_footer_branch
      %13 = sbr.rel target = $region3
    $region8: #{patch_embedding.1} parent=1 // loop_exit
      _
    %1260 = vsyncpa [#allocation4], 1
    %s1261 = scalar_lea.sflag [#allocation4], 1
    %1262 = vsyncpa %s1261, 1

</llo_original>
